<compile_context>
chip_gen: v5e
topology: v5e:2x2
jax: 0.10.0
libtpu: 0.0.40
codegen_flags: <defaults>
</compile_context>

<pallas_src>
import math
import functools

import jax
import jax.numpy as jnp
from jax.experimental import pallas as pl
from jax.experimental.pallas import tpu as pltpu


def _round_up(n, m):
    return ((n + m - 1) // m) * m


def _soft_triple_kernel(x_ref, w_ref, out_ref, *, num_proxies, c_pad, gamma_inv):
    x = x_ref[...]      # (TB, D)  f32
    w = w_ref[...]      # (D, P*Cp) f32, columns already L2-normalized (proxy-major)

    # Row L2-normalize x.  rsqrt runs on the EUP (its own VLIW slot).
    # x * rsqrt(max(||x||^2, eps^2)) == x / max(||x||, eps)  (matches F.normalize).
    ssq = jnp.sum(x * x, axis=1, keepdims=True)
    xn = x * jax.lax.rsqrt(jnp.maximum(ssq, 1e-24))

    # Cosine similarities on the MXU.  Proxy-major layout: columns
    # [p*Cp, (p+1)*Cp) hold proxy p's similarities for all (padded) classes.
    sim = jnp.dot(xn, w, preferred_element_type=jnp.float32)   # (TB, P*Cp)

    # Proxy softmax, unrolled over the (tiny) proxy count as full-width lane slices
    # -- slice boundaries are multiples of 128 lanes, so no relayout copies.
    sims = [sim[:, p * c_pad:(p + 1) * c_pad] for p in range(num_proxies)]
    scaled = [s * gamma_inv for s in sims]

    m = scaled[0]
    for p in range(1, num_proxies):
        m = jnp.maximum(m, scaled[p])

    num = None
    den = None
    for p in range(num_proxies):
        e = jnp.exp(scaled[p] - m)
        num = e * sims[p] if num is None else num + e * sims[p]
        den = e if den is None else den + e

    # sum_p softmax_p * sim_p == (sum_p e_p * sim_p) * (1 / sum_p e_p)
    out_ref[...] = (num * pl.reciprocal(den, approx=True)).astype(out_ref.dtype)


def soft_triple_linear(x, weight, *, out_features, num_proxies, gamma=0.1,
                       block_b=512):
    """x: (B, in_features) f32; weight: (in_features, out_features*num_proxies) f32."""
    B, D = x.shape
    C, P = out_features, num_proxies
    assert weight.shape == (D, C * P)
    x = x.astype(jnp.float32)
    weight = weight.astype(jnp.float32)

    eps = 1e-12
    # Hoisted out of the kernel (once per call, fused by XLA): per-column L2 norm.
    wn = weight / jnp.maximum(
        jnp.sqrt(jnp.sum(weight * weight, axis=0, keepdims=True)), eps)

    # Proxy-major + lane-dense class padding: (D, C*P) -> (D, P, Cp) -> (D, P*Cp).
    c_pad = _round_up(max(C, 128), 128)
    wn = wn.reshape(D, C, P).transpose(0, 2, 1)            # (D, P, C)
    if c_pad != C:
        wn = jnp.pad(wn, ((0, 0), (0, 0), (0, c_pad - C)))  # zero cols -> sim 0, sliced off
    wn = wn.reshape(D, P * c_pad)

    # Batch tiling (sublane-aligned); pad B so the grid divides evenly.
    tb = min(block_b, _round_up(B, 8))
    b_pad = _round_up(B, tb)
    if b_pad != B:
        x = jnp.pad(x, ((0, b_pad - B), (0, 0)))
    grid = (b_pad // tb,)

    # VMEM budget: resident weight + double-buffered x/out tiles, with headroom.
    working = 4 * (2 * D * P * c_pad + 2 * tb * D + 2 * tb * c_pad)
    vmem_limit = int(min(100 * 1024 * 1024, max(4 * 1024 * 1024, 2 * working)))

    kernel = functools.partial(
        _soft_triple_kernel,
        num_proxies=P, c_pad=c_pad, gamma_inv=1.0 / gamma)

    out = pl.pallas_call(
        kernel,
        out_shape=jax.ShapeDtypeStruct((b_pad, c_pad), jnp.float32),
        grid=grid,
        in_specs=[
            pl.BlockSpec((tb, D), lambda i: (i, 0)),          # x: streamed per step
            pl.BlockSpec((D, P * c_pad), lambda i: (0, 0)),   # weight: VMEM-resident
        ],
        out_specs=pl.BlockSpec((tb, c_pad), lambda i: (i, 0)),  # lane-dense stores
        compiler_params=pltpu.CompilerParams(
            dimension_semantics=("parallel",),
            vmem_limit_bytes=vmem_limit),
    )(x, wn)

    return out[:B, :C]


def _reference(x, weight, *, out_features, num_proxies, gamma=0.1):
    eps = 1e-12
    wn = weight / jnp.maximum(jnp.linalg.norm(weight, axis=0, keepdims=True), eps)
    xn = x / jnp.maximum(jnp.linalg.norm(x, axis=1, keepdims=True), eps)
    sim = (xn @ wn).reshape(-1, out_features, num_proxies)
    prob = jax.nn.softmax(sim * (1.0 / gamma), axis=2)
    return jnp.sum(prob * sim, axis=2)


if __name__ == "__main__":
    # Small, module-consistent shapes.
    B, in_features, out_features, num_proxies = 8, 32, 8, 2
    gamma = 0.1

    key = jax.random.PRNGKey(0)
    kx, kw = jax.random.split(key)

    x = jax.random.normal(kx, (B, in_features), dtype=jnp.float32)

    # Deterministic kaiming_uniform_(a=sqrt(5)) equivalent:
    # fan_in = weight.shape[1]; bound = sqrt(2/(1+a^2)) * sqrt(3/fan_in) = 1/sqrt(fan_in)
    fan_in = out_features * num_proxies
    bound = 1.0 / math.sqrt(fan_in)
    weight = jax.random.uniform(
        kw, (in_features, out_features * num_proxies),
        minval=-bound, maxval=bound, dtype=jnp.float32)

    out = soft_triple_linear(
        x, weight, out_features=out_features, num_proxies=num_proxies, gamma=gamma)
    out = jax.block_until_ready(out)

    ref = _reference(x, weight, out_features=out_features,
                     num_proxies=num_proxies, gamma=gamma)
    assert out.shape == (B, out_features)
    max_err = float(jnp.max(jnp.abs(out - ref)))
    # Tolerance loosened slightly for the EUP approximate reciprocal in the softmax.
    assert max_err < 2e-3, f"max abs err {max_err}"

    print("KERNEL_OK")
</pallas_src>

<mosaic_0001>
module attributes {stable_mosaic.version = 11 : i64} {
  func.func @_soft_triple_kernel(%arg0: i32, %arg1: memref<8x32xf32, #tpu.memory_space<vmem>>, %arg2: memref<32x256xf32, #tpu.memory_space<vmem>>, %arg3: memref<8x128xf32, #tpu.memory_space<vmem>>) attributes {dimension_semantics = [#tpu.dimension_semantics<parallel>], iteration_bounds = array<i64: 1>, scalar_prefetch = 0 : i64, scratch_operands = 0 : i64, tpu.core_type = #tpu.core_type<tc>, window_params = [{transform_indices = @transform_0, window_bounds = array<i64: 8, 32>}, {pipeline_mode = #tpu.pipeline_mode<synchronous>, transform_indices = @transform_1, window_bounds = array<i64: 32, 256>}, {transform_indices = @transform_2, window_bounds = array<i64: 8, 128>}]} {
    %c0 = arith.constant 0 : index
    %c0_0 = arith.constant 0 : index
    %0 = vector.load %arg1[%c0, %c0_0] : memref<8x32xf32, #tpu.memory_space<vmem>>, vector<8x32xf32>
    %c0_1 = arith.constant 0 : index
    %c0_2 = arith.constant 0 : index
    %1 = vector.load %arg2[%c0_1, %c0_2] : memref<32x256xf32, #tpu.memory_space<vmem>>, vector<32x256xf32>
    %2 = arith.mulf %0, %0 : vector<8x32xf32>
    %cst = arith.constant dense<0.000000e+00> : vector<8xf32>
    %3 = vector.multi_reduction <add>, %2, %cst [1] : vector<8x32xf32> to vector<8xf32>
    %4 = vector.shape_cast %3 : vector<8xf32> to vector<8x1xf32>
    %cst_3 = arith.constant 1.000000e-24 : f32
    %5 = vector.broadcast %cst_3 : f32 to vector<8x1xf32>
    %6 = arith.maximumf %4, %5 : vector<8x1xf32>
    %7 = math.rsqrt %6 : vector<8x1xf32>
    %8 = vector.broadcast %7 : vector<8x1xf32> to vector<8x32xf32>
    %9 = arith.mulf %0, %8 : vector<8x32xf32>
    %cst_4 = arith.constant dense<0.000000e+00> : vector<8x256xf32>
    %10 = tpu.matmul %9, %1, %cst_4 {dimension_numbers = #tpu.dot_dimension_numbers<[1], [0], [0], [1], [0, 0, 1, 1], [], []>} : vector<8x32xf32>, vector<32x256xf32>, vector<8x256xf32> -> vector<8x256xf32>
    %11 = vector.extract_strided_slice %10 {offsets = [0, 0], sizes = [8, 128], strides = [1, 1]} : vector<8x256xf32> to vector<8x128xf32>
    %12 = vector.extract_strided_slice %10 {offsets = [0, 128], sizes = [8, 128], strides = [1, 1]} : vector<8x256xf32> to vector<8x128xf32>
    %cst_5 = arith.constant 1.000000e+01 : f32
    %13 = vector.broadcast %cst_5 : f32 to vector<8x128xf32>
    %14 = arith.mulf %11, %13 : vector<8x128xf32>
    %cst_6 = arith.constant 1.000000e+01 : f32
    %15 = vector.broadcast %cst_6 : f32 to vector<8x128xf32>
    %16 = arith.mulf %12, %15 : vector<8x128xf32>
    %17 = arith.maximumf %14, %16 : vector<8x128xf32>
    %18 = arith.subf %14, %17 : vector<8x128xf32>
    %19 = math.exp %18 : vector<8x128xf32>
    %20 = arith.mulf %19, %11 : vector<8x128xf32>
    %21 = arith.subf %16, %17 : vector<8x128xf32>
    %22 = math.exp %21 : vector<8x128xf32>
    %23 = arith.mulf %22, %12 : vector<8x128xf32>
    %24 = arith.addf %20, %23 : vector<8x128xf32>
    %25 = arith.addf %19, %22 : vector<8x128xf32>
    %26 = tpu.reciprocal %25 {approx = true} : vector<8x128xf32> -> vector<8x128xf32>
    %27 = arith.mulf %24, %26 : vector<8x128xf32>
    %c0_7 = arith.constant 0 : index
    %c0_8 = arith.constant 0 : index
    %28 = vector.load %arg3[%c0_7, %c0_8] : memref<8x128xf32, #tpu.memory_space<vmem>>, vector<8x128xf32>
    tpu.vector_store %arg3[%c0_7, %c0_8], %27 {strides = array<i32>} : memref<8x128xf32, #tpu.memory_space<vmem>>, vector<8x128xf32>,
    return
  }
  func.func @transform_0(%arg0: i32) -> (i32, i32) {
    %c0_i32 = arith.constant 0 : i32
    %c0_i32_0 = arith.constant 0 : i32
    return %arg0, %c0_i32 : i32, i32
  }
  func.func @transform_1(%arg0: i32) -> (i32, i32) {
    %c0_i32 = arith.constant 0 : i32
    %c0_i32_0 = arith.constant 0 : i32
    %c0_i32_1 = arith.constant 0 : i32
    return %c0_i32, %c0_i32_0 : i32, i32
  }
  func.func @transform_2(%arg0: i32) -> (i32, i32) {
    %c0_i32 = arith.constant 0 : i32
    %c0_i32_0 = arith.constant 0 : i32
    return %arg0, %c0_i32 : i32, i32
  }
}

</mosaic_0001>

<llo_original>
// kernel: tpu_custom_call.1
$region0: #{tpu_custom_call.1}
  #allocation0 [shape = 'u32[]', space=smem, size = 0x4, offset = 0x4, fixed_abs, tag = 'smem constant byte address 0x4 - core index']
  #allocation1 [shape = 'u32[72,128]{1,0:T(1,128)}', space=vmem, size = 0x9000, scoped, tag = 'internal scratch']
  %s0 = inlined_call_operand.hbm [shape: f32[8,32], index: 0, kind: input, shape index: {}]
  %s1 = inlined_call_operand.hbm [shape: f32[32,256], index: 1, kind: input, shape index: {}]
  %s2 = inlined_call_operand.hbm [shape: f32[8,128], index: 2, kind: output, shape index: {}]
  %s3 = sld [smem:[#allocation0]]
  $region26: #{tpu_custom_call.1} parent=0
    _
  %s5 = ssub.s32 1, %s3
  %s6 = scalar_select 0, %s5, %s3
  $region1: #{tpu_custom_call.1} parent=0
    #allocation2 [shape = 'u8[4096]{0}', space=vmem, size = 0x1000, scoped, tag = 'input window, operand 0, single buffered']
    #allocation3 [shape = 's32[1]{0}', space=sflag, size = 0x4, scoped, tag = 'scoped memory for tpu_custom_call.1']
    #allocation4 [shape = 's32[1]{0}', space=sflag, size = 0x4, scoped, tag = 'scoped memory for tpu_custom_call.1']
    #allocation5 [shape = 'u8[32768]{0}', space=vmem, size = 0x8000, scoped, tag = 'input window, operand 1, single buffered']
    #allocation6 [shape = 's32[1]{0}', space=sflag, size = 0x4, scoped, tag = 'scoped memory for tpu_custom_call.1']
    #allocation7 [shape = 'u8[4096]{0}', space=vmem, size = 0x1000, scoped, tag = 'output window, operand 0, single buffered']
    %7 = vsyncpa [#allocation3], 0
    %8 = vsyncpa [#allocation6], 0
    %9 = vsyncpa [#allocation4], 0
    // Predicated region
    $region2: #{tpu_custom_call.1} parent=1 // pred_check
      _
    $region3: #{tpu_custom_call.1} parent=1 // pred_check_branch
      %11 = sbr.rel (0) target = $region5
    $region4: #{tpu_custom_call.1} parent=1 // pred_region
      %13 = vsyncadd [#allocation3], 0
      %s15 = sshll.u32 %s0, 4
      %s16 = int_to_ptr.hbm [resolvable:$true] %s15
      %s17 = sshll.u32 [#allocation2], 4
      %s18 = int_to_ptr.vmem [resolvable:$true] %s17
      %20 = dma.hbm_to_vmem [thread:$0]  %s16, 128, %s18, [#allocation3]
    $region5: #{tpu_custom_call.1} parent=1 // pred_fallthru
      _
    // Predicated region
    $region6: #{tpu_custom_call.1} parent=1 // pred_check
      _
    $region7: #{tpu_custom_call.1} parent=1 // pred_check_branch
      %22 = sbr.rel (0) target = $region9
    $region8: #{tpu_custom_call.1} parent=1 // pred_region
      %24 = vsyncadd [#allocation6], 0
      %s25 = sshll.u32 %s1, 4
      %s26 = int_to_ptr.hbm [resolvable:$true] %s25
      %s27 = sshll.u32 [#allocation5], 4
      %s28 = int_to_ptr.vmem [resolvable:$true] %s27
      %33 = dma.hbm_to_vmem [thread:$0]  %s26, 1024, %s28, [#allocation6], 256, 256, 16
    $region9: #{tpu_custom_call.1} parent=1 // pred_fallthru
      _
    // Predicated region
    $region10: #{tpu_custom_call.1} parent=1 // pred_check
      _
    $region11: #{tpu_custom_call.1} parent=1 // pred_check_branch
      %35 = sbr.rel (0) target = $region13
    $region12: #{tpu_custom_call.1} parent=1 // pred_region
      %37 = dma.done [#allocation3], 128
    $region13: #{tpu_custom_call.1} parent=1 // pred_fallthru
      _
    // Predicated region
    $region14: #{tpu_custom_call.1} parent=1 // pred_check
      _
    $region15: #{tpu_custom_call.1} parent=1 // pred_check_branch
      %39 = sbr.rel (0) target = $region17
    $region16: #{tpu_custom_call.1} parent=1 // pred_region
      %41 = dma.done [#allocation6], 1024
    $region17: #{tpu_custom_call.1} parent=1 // pred_fallthru
      _
    %v42 = vld [vmem:[#allocation2] sm:$0xff]
    %v43 = vld [vmem:[#allocation5] sm:$0xff]
    %v44 = vld [vmem:[#allocation5 + $0x8] sm:$0xff]
    %v45 = vld [vmem:[#allocation5 + $0x10] sm:$0xff]
    %v46 = vld [vmem:[#allocation5 + $0x18] sm:$0xff]
    %v47 = vld [vmem:[#allocation5 + $0x20] sm:$0xff]
    %v48 = vld [vmem:[#allocation5 + $0x28] sm:$0xff]
    %v49 = vld [vmem:[#allocation5 + $0x30] sm:$0xff]
    %v50 = vld [vmem:[#allocation5 + $0x38] sm:$0xff]
    %v51 = vmul.f32 %v42, %v42
    %vm52 = vcmask 261120
    %v53 = vsel %vm52, %v51, 0.0
    %54 = vadd.xlane.f32.xlu0 %v53
    %v55 = vpop.xlane.xlu0 %54
    %v56 = vmax.f32 %v55, 1e-24
    %v57 = vrsqrt.pop %v56
    %v58 = vmul.f32 %v57, %v56
    %v59 = vmul.f32 %v58, %v57
    %v60 = vmul.f32 0.5, %v59
    %v61 = vsub.f32 1.5, %v60
    %v62 = vmul.f32 %v57, %v61
    %vm63 = vweird.f32 %v56
    %vm64 = vweird.f32 %v57
    %vm65 = vmor %vm63, %vm64
    %v66 = vsel %vm65, %v57, %v62
    %v67 = vmul.f32 %v42, %v66
    %v69 = vsel %vm52, %v67, 0
    %71 = vmatpush.msra.mxu0 0.0
    %72 = vmatpush.msra.mxu0 0.0
    %73 = vmatpush.msra.mxu0 0.0
    %74 = vmatpush.msra.mxu0 0.0
    %75 = vmatpush.msra.mxu0 0.0
    %76 = vmatpush.msra.mxu0 0.0
    %77 = vmatpush.msra.mxu0 0.0
    %78 = vmatpush.msra.mxu0 0.0
    %79 = vmatpush.msra.mxu0 0.0
    %80 = vmatpush.msra.mxu0 0.0
    %81 = vmatpush.msra.mxu0 0.0
    %82 = vmatpush.msra.mxu0 0.0
    %83 = vmatpush.msra.mxu0 %v49
    %84 = vmatpush.msra.mxu0 %v47
    %85 = vmatpush.msra.mxu0 %v45
    %86 = vmatpush.msra.mxu0 %v43
    %87 = vmatmul.f32.gmra.mxu0 %v69
    %v88 = vpop.f32.mrf.mxu0
    %v89 = vadd.f32 0.0, %v88
    %90 = vdwg.mxu0
    %91 = vmatpush.msra.mxu0 0.0
    %92 = vmatpush.msra.mxu0 0.0
    %93 = vmatpush.msra.mxu0 0.0
    %94 = vmatpush.msra.mxu0 0.0
    %95 = vmatpush.msra.mxu0 0.0
    %96 = vmatpush.msra.mxu0 0.0
    %97 = vmatpush.msra.mxu0 0.0
    %98 = vmatpush.msra.mxu0 0.0
    %99 = vmatpush.msra.mxu0 0.0
    %100 = vmatpush.msra.mxu0 0.0
    %101 = vmatpush.msra.mxu0 0.0
    %102 = vmatpush.msra.mxu0 0.0
    %103 = vmatpush.msra.mxu0 %v50
    %104 = vmatpush.msra.mxu0 %v48
    %105 = vmatpush.msra.mxu0 %v46
    %106 = vmatpush.msra.mxu0 %v44
    %107 = vmatmul.f32.gmra.mxu0 %v69
    %v108 = vpop.f32.mrf.mxu0
    %v109 = vadd.f32 0.0, %v108
    %110 = vdwg.mxu0
    %v111 = vmul.f32 %v89, 10.0
    %v112 = vmul.f32 %v109, 10.0
    %v113 = vmax.f32 %v111, %v112
    %v114 = vsub.f32 %v111, %v113
    %v115 = vmul.f32 %v114, 1.442695
    %v116 = vpow.pop %v115
    %v117 = vmul.f32 %v116, %v89
    %v118 = vsub.f32 %v112, %v113
    %v119 = vmul.f32 %v118, 1.442695
    %v120 = vpow.pop %v119
    %v121 = vmul.f32 %v120, %v109
    %v122 = vadd.f32 %v117, %v121
    %v123 = vadd.f32 %v116, %v120
    %v124 = vrcp.pop %v123
    %v125 = vmul.f32 %v122, %v124
    %126 = vst [vmem:[#allocation7] sm:$0xff] %v125
    // Predicated region
    $region18: #{tpu_custom_call.1} parent=1 // pred_check
      _
    $region19: #{tpu_custom_call.1} parent=1 // pred_check_branch
      %128 = sbr.rel (0) target = $region21
    $region20: #{tpu_custom_call.1} parent=1 // pred_region
      %130 = vsyncadd [#allocation4], 0
      %s132 = sshll.u32 [#allocation7], 4
      %s133 = int_to_ptr.vmem [resolvable:$true] %s132
      %s134 = sshll.u32 %s2, 4
      %s135 = int_to_ptr.hbm [resolvable:$true] %s134
      %137 = dma.vmem_to_hbm [thread:$0]  %s133, 128, %s135, [#allocation4]
    $region21: #{tpu_custom_call.1} parent=1 // pred_fallthru
      _
    // Predicated region
    $region22: #{tpu_custom_call.1} parent=1 // pred_check
      _
    $region23: #{tpu_custom_call.1} parent=1 // pred_check_branch
      %139 = sbr.rel (0) target = $region25
    $region24: #{tpu_custom_call.1} parent=1 // pred_region
      %141 = dma.done [#allocation4], 128
    $region25: #{tpu_custom_call.1} parent=1 // pred_fallthru
      _
    %142 = vsyncpa [#allocation3], 1
    %143 = vsyncpa [#allocation6], 1
    %144 = vsyncpa [#allocation4], 1

</llo_original>
